<compile_context>
chip_gen: v6e
topology: v6e:2x2x1
jax: 0.10.0
libtpu: 0.0.40
codegen_flags: <defaults>
</compile_context>

<pallas_src>
import functools

import jax
import jax.numpy as jnp
from jax.experimental import pallas as pl
from jax.experimental.pallas import tpu as pltpu


def _round_up(x, m):
    return (x + m - 1) // m * m


def _reward_criterion_kernel(inp_ref, seq_ref, rew_ref, out_ref, *,
                             seq_len, n_valid_rows):
    # Upcast per-tile in VMEM (free on the VPU); HBM traffic stays native dtype.
    inp = inp_ref[...].astype(jnp.float32)
    rew = rew_ref[...].astype(jnp.float32)
    seq = seq_ref[...]
    TB, L = inp.shape

    # mask[r, c] = 1.0 at every original-row start (c % seq_len == 0),
    # else float(seq[r, c-1] > 0).  The lane-rotate wraparound values land only
    # on row-start columns, which are overwritten by the where-clause.
    prev = (seq > 0).astype(jnp.float32)
    shifted = pltpu.roll(prev, shift=1, axis=1)                 # XLU, off VALU path
    col = jax.lax.broadcasted_iota(jnp.int32, (TB, L), 1)
    mask = jnp.where(col % seq_len == 0, jnp.float32(1.0), shifted)

    # Zero out padding rows (batch padded up to a multiple of TB).
    row = pl.program_id(0) * TB + jax.lax.broadcasted_iota(jnp.int32, (TB, L), 0)
    mask = jnp.where(row < n_valid_rows, mask, jnp.float32(0.0))

    num = jnp.sum(-inp * rew * mask)
    den = jnp.sum(mask)

    # Lane-dense, fully (8,128)-aligned partial-sum tile: num @ [0,0], den @ [0,1].
    sub = jax.lax.broadcasted_iota(jnp.int32, (8, 128), 0)
    lane = jax.lax.broadcasted_iota(jnp.int32, (8, 128), 1)
    tile = jnp.where((sub == 0) & (lane == 0), num,
                     jnp.where((sub == 0) & (lane == 1), den, jnp.float32(0.0)))
    out_ref[...] = tile[None]


def reward_criterion(inp, seq, reward, *, block_elems=256 * 1024,
                     max_lane_fold=128):
    """loss = sum(-inp * reward * mask) / sum(mask), mask per RewardCriterion."""
    B, T = inp.shape
    assert seq.shape == (B, T) and reward.shape == (B, T)

    # Fold rows into the lane axis: smallest k with B % k == 0 and (k*T) % 128 == 0.
    k = 1
    for cand in range(1, min(B, max_lane_fold) + 1):
        if B % cand == 0 and (cand * T) % 128 == 0:
            k = cand
            break
    R, L = B // k, k * T

    inp2 = inp.reshape(R, L)                       # native dtype (bf16/f32/...)
    rew2 = reward.reshape(R, L)
    seq2 = seq.reshape(R, L).astype(jnp.int32)

    # Block rows: multiple of 16 (safe for bf16 sublane packing), capped so each
    # input block stays ~<=1 MiB f32 -> double-buffered x3 inputs fits every
    # generation's scoped-VMEM default without raising vmem_limit_bytes.
    align = 16
    tb_cap = max(align, (block_elems // L) // align * align)
    TB = min(tb_cap, _round_up(R, align))
    R_pad = _round_up(R, TB)
    if R_pad != R:
        pad = R_pad - R
        inp2 = jnp.pad(inp2, ((0, pad), (0, 0)))
        rew2 = jnp.pad(rew2, ((0, pad), (0, 0)))
        seq2 = jnp.pad(seq2, ((0, pad), (0, 0)))
    grid = R_pad // TB

    kernel = functools.partial(_reward_criterion_kernel,
                               seq_len=T, n_valid_rows=R)

    partials = pl.pallas_call(
        kernel,
        out_shape=jax.ShapeDtypeStruct((grid, 8, 128), jnp.float32),
        grid=(grid,),
        in_specs=[
            pl.BlockSpec((TB, L), lambda i: (i, 0)),
            pl.BlockSpec((TB, L), lambda i: (i, 0)),
            pl.BlockSpec((TB, L), lambda i: (i, 0)),
        ],
        out_specs=pl.BlockSpec((1, 8, 128), lambda i: (i, 0, 0)),
        compiler_params=pltpu.CompilerParams(
            dimension_semantics=("parallel",)),
    )(inp2, seq2, rew2)

    num = jnp.sum(partials[:, 0, 0])
    den = jnp.sum(partials[:, 0, 1])
    return num / den


if __name__ == "__main__":
    key = jax.random.PRNGKey(0)
    k1, k2, k3 = jax.random.split(key, 3)
    B, T = 16, 32
    inp = jax.random.normal(k1, (B, T), dtype=jnp.float32)        # log-probs
    reward = jax.random.normal(k2, (B, T), dtype=jnp.float32)     # per-token reward
    seq = jax.random.randint(k3, (B, T), 0, 5, dtype=jnp.int32)   # tokens (0 = pad)

    out = jax.block_until_ready(reward_criterion(inp, seq, reward))

    # pure-JAX reference (mirrors the PyTorch forward exactly)
    prev = (seq > 0).astype(jnp.float32)
    mask = jnp.concatenate([jnp.ones((B, 1), jnp.float32), prev[:, :-1]], axis=1)
    ref = jnp.sum(-inp * reward * mask) / jnp.sum(mask)

    assert jnp.allclose(out, ref, atol=1e-5, rtol=1e-5), (out, ref)
    print("KERNEL_OK")
</pallas_src>

<mosaic_0001>
module attributes {stable_mosaic.version = 11 : i64} {
  func.func @_reward_criterion_kernel(%arg0: i32, %arg1: memref<16x128xf32, #tpu.memory_space<vmem>>, %arg2: memref<16x128xi32, #tpu.memory_space<vmem>>, %arg3: memref<16x128xf32, #tpu.memory_space<vmem>>, %arg4: memref<1x8x128xf32, #tpu.memory_space<vmem>>) attributes {dimension_semantics = [#tpu.dimension_semantics<parallel>], iteration_bounds = array<i64: 1>, scalar_prefetch = 0 : i64, scratch_operands = 0 : i64, tpu.core_type = #tpu.core_type<tc>, window_params = [{transform_indices = @transform_0, window_bounds = array<i64: 16, 128>}, {transform_indices = @transform_1, window_bounds = array<i64: 16, 128>}, {transform_indices = @transform_2, window_bounds = array<i64: 16, 128>}, {transform_indices = @transform_3, window_bounds = array<i64: 1, 8, 128>}]} {
    %c0 = arith.constant 0 : index
    %c0_0 = arith.constant 0 : index
    %0 = vector.load %arg1[%c0, %c0_0] : memref<16x128xf32, #tpu.memory_space<vmem>>, vector<16x128xf32>
    %c0_1 = arith.constant 0 : index
    %c0_2 = arith.constant 0 : index
    %1 = vector.load %arg3[%c0_1, %c0_2] : memref<16x128xf32, #tpu.memory_space<vmem>>, vector<16x128xf32>
    %c0_3 = arith.constant 0 : index
    %c0_4 = arith.constant 0 : index
    %2 = vector.load %arg2[%c0_3, %c0_4] : memref<16x128xi32, #tpu.memory_space<vmem>>, vector<16x128xi32>
    %c0_i32 = arith.constant 0 : i32
    %3 = vector.broadcast %c0_i32 : i32 to vector<16x128xi32>
    %4 = arith.cmpi sgt, %2, %3 : vector<16x128xi32>
    %5 = arith.extui %4 : vector<16x128xi1> to vector<16x128xi32>
    %6 = arith.sitofp %5 : vector<16x128xi32> to vector<16x128xf32>
    %c1_i32 = arith.constant 1 : i32
    %7 = tpu.dynamic_rotate %6 by %c1_i32 dim 1 : vector<16x128xf32>, i32 -> vector<16x128xf32>
    %8 = tpu.iota {dimensions = array<i32: 1>} : vector<16x128xi32>
    %c32_i32 = arith.constant 32 : i32
    %c0_i32_5 = arith.constant 0 : i32
    %9 = arith.cmpi eq, %c32_i32, %c0_i32_5 : i32
    %c1_i32_6 = arith.constant 1 : i32
    %10 = arith.select %9, %c1_i32_6, %c32_i32 : i32
    %11 = vector.broadcast %10 : i32 to vector<16x128xi32>
    %12 = arith.remsi %8, %11 : vector<16x128xi32>
    %c0_i32_7 = arith.constant 0 : i32
    %13 = vector.broadcast %c0_i32_7 : i32 to vector<16x128xi32>
    %14 = arith.cmpi ne, %12, %13 : vector<16x128xi32>
    %c0_i32_8 = arith.constant 0 : i32
    %15 = vector.broadcast %c0_i32_8 : i32 to vector<16x128xi32>
    %16 = arith.cmpi slt, %12, %15 : vector<16x128xi32>
    %c0_i32_9 = arith.constant 0 : i32
    %17 = arith.cmpi slt, %10, %c0_i32_9 : i32
    %18 = vector.broadcast %17 : i1 to vector<16x128xi1>
    %19 = vector.broadcast %18 : vector<16x128xi1> to vector<16x128xi1>
    %20 = arith.xori %16, %19 : vector<16x128xi1>
    %21 = arith.andi %20, %14 : vector<16x128xi1>
    %22 = vector.broadcast %10 : i32 to vector<16x128xi32>
    %23 = arith.addi %12, %22 : vector<16x128xi32>
    %24 = arith.select %21, %23, %12 : vector<16x128xi1>, vector<16x128xi32>
    %c0_i32_10 = arith.constant 0 : i32
    %25 = vector.broadcast %c0_i32_10 : i32 to vector<16x128xi32>
    %26 = arith.cmpi eq, %24, %25 : vector<16x128xi32>
    %cst = arith.constant 1.000000e+00 : f32
    %27 = vector.broadcast %cst : f32 to vector<16x128xf32>
    %28 = arith.select %26, %27, %7 : vector<16x128xi1>, vector<16x128xf32>
    %c16_i32 = arith.constant 16 : i32
    %29 = arith.muli %arg0, %c16_i32 : i32
    %30 = tpu.iota {dimensions = array<i32: 0>} : vector<16x128xi32>
    %31 = vector.broadcast %29 : i32 to vector<16x128xi32>
    %32 = arith.addi %31, %30 : vector<16x128xi32>
    %c4_i32 = arith.constant 4 : i32
    %33 = vector.broadcast %c4_i32 : i32 to vector<16x128xi32>
    %34 = arith.cmpi slt, %32, %33 : vector<16x128xi32>
    %cst_11 = arith.constant 0.000000e+00 : f32
    %35 = vector.broadcast %cst_11 : f32 to vector<16x128xf32>
    %36 = arith.select %34, %28, %35 : vector<16x128xi1>, vector<16x128xf32>
    %cst_12 = arith.constant 0.000000e+00 : f32
    %37 = vector.broadcast %cst_12 : f32 to vector<16x128xf32>
    %38 = arith.subf %37, %0 : vector<16x128xf32>
    %39 = arith.mulf %38, %1 : vector<16x128xf32>
    %40 = arith.mulf %39, %36 : vector<16x128xf32>
    %41 = vector.shape_cast %40 : vector<16x128xf32> to vector<1x16x128xf32>
    %cst_13 = arith.constant dense<0.000000e+00> : vector<1xf32>
    %42 = vector.multi_reduction <add>, %41, %cst_13 [1, 2] : vector<1x16x128xf32> to vector<1xf32>
    %43 = vector.shape_cast %42 : vector<1xf32> to vector<1x1x1xf32>
    %44 = vector.extract %43[0, 0, 0] : f32 from vector<1x1x1xf32>
    %45 = vector.shape_cast %36 : vector<16x128xf32> to vector<1x16x128xf32>
    %cst_14 = arith.constant dense<0.000000e+00> : vector<1xf32>
    %46 = vector.multi_reduction <add>, %45, %cst_14 [1, 2] : vector<1x16x128xf32> to vector<1xf32>
    %47 = vector.shape_cast %46 : vector<1xf32> to vector<1x1x1xf32>
    %48 = vector.extract %47[0, 0, 0] : f32 from vector<1x1x1xf32>
    %49 = tpu.iota {dimensions = array<i32: 0>} : vector<8x128xi32>
    %50 = tpu.iota {dimensions = array<i32: 1>} : vector<8x128xi32>
    %c0_i32_15 = arith.constant 0 : i32
    %51 = vector.broadcast %c0_i32_15 : i32 to vector<8x128xi32>
    %52 = arith.cmpi eq, %49, %51 : vector<8x128xi32>
    %c0_i32_16 = arith.constant 0 : i32
    %53 = vector.broadcast %c0_i32_16 : i32 to vector<8x128xi32>
    %54 = arith.cmpi eq, %50, %53 : vector<8x128xi32>
    %55 = arith.andi %52, %54 : vector<8x128xi1>
    %c0_i32_17 = arith.constant 0 : i32
    %56 = vector.broadcast %c0_i32_17 : i32 to vector<8x128xi32>
    %57 = arith.cmpi eq, %49, %56 : vector<8x128xi32>
    %c1_i32_18 = arith.constant 1 : i32
    %58 = vector.broadcast %c1_i32_18 : i32 to vector<8x128xi32>
    %59 = arith.cmpi eq, %50, %58 : vector<8x128xi32>
    %60 = arith.andi %57, %59 : vector<8x128xi1>
    %cst_19 = arith.constant 0.000000e+00 : f32
    %61 = vector.broadcast %48 : f32 to vector<8x128xf32>
    %62 = vector.broadcast %cst_19 : f32 to vector<8x128xf32>
    %63 = arith.select %60, %61, %62 : vector<8x128xi1>, vector<8x128xf32>
    %64 = vector.broadcast %44 : f32 to vector<8x128xf32>
    %65 = arith.select %55, %64, %63 : vector<8x128xi1>, vector<8x128xf32>
    %66 = vector.shape_cast %65 : vector<8x128xf32> to vector<1x8x128xf32>
    %c0_20 = arith.constant 0 : index
    %c0_21 = arith.constant 0 : index
    %c0_22 = arith.constant 0 : index
    %67 = vector.load %arg4[%c0_20, %c0_21, %c0_22] : memref<1x8x128xf32, #tpu.memory_space<vmem>>, vector<1x8x128xf32>
    tpu.vector_store %arg4[%c0_20, %c0_21, %c0_22], %66 {strides = array<i32>} : memref<1x8x128xf32, #tpu.memory_space<vmem>>, vector<1x8x128xf32>,
    return
  }
  func.func @transform_0(%arg0: i32) -> (i32, i32) {
    %c0_i32 = arith.constant 0 : i32
    %c0_i32_0 = arith.constant 0 : i32
    return %arg0, %c0_i32 : i32, i32
  }
  func.func @transform_1(%arg0: i32) -> (i32, i32) {
    %c0_i32 = arith.constant 0 : i32
    %c0_i32_0 = arith.constant 0 : i32
    return %arg0, %c0_i32 : i32, i32
  }
  func.func @transform_2(%arg0: i32) -> (i32, i32) {
    %c0_i32 = arith.constant 0 : i32
    %c0_i32_0 = arith.constant 0 : i32
    return %arg0, %c0_i32 : i32, i32
  }
  func.func @transform_3(%arg0: i32) -> (i32, i32, i32) {
    %c0_i32 = arith.constant 0 : i32
    %c0_i32_0 = arith.constant 0 : i32
    %c0_i32_1 = arith.constant 0 : i32
    return %arg0, %c0_i32, %c0_i32_0 : i32, i32, i32
  }
}

</mosaic_0001>

<llo_original>
// kernel: tpu_custom_call.1
$region0: #{tpu_custom_call.1}
  #allocation0 [shape = 'u32[]', space=smem, size = 0x4, offset = 0x4, fixed_abs, tag = 'smem constant byte address 0x4 - core index']
  #allocation1 [shape = 'u32[144,128]{1,0:T(1,128)}', space=vmem, size = 0x12000, scoped, tag = 'internal scratch']
  %s0 = inlined_call_operand.hbm [shape: f32[16,128], index: 0, kind: input, shape index: {}]
  %s1 = inlined_call_operand.hbm [shape: s32[16,128], index: 1, kind: input, shape index: {}]
  %s2 = inlined_call_operand.hbm [shape: f32[16,128], index: 2, kind: input, shape index: {}]
  %s3 = inlined_call_operand.hbm [shape: f32[1,8,128], index: 3, kind: output, shape index: {}]
  %s4 = sld [smem:[#allocation0]]
  $region34: #{tpu_custom_call.1} parent=0
    _
  %s6 = ssub.s32 1, %s4
  %s7 = scalar_select 0, %s6, %s4
  $region1: #{tpu_custom_call.1} parent=0
    #allocation2 [shape = 'u8[8192]{0}', space=vmem, size = 0x2000, scoped, tag = 'input window, operand 0, single buffered']
    #allocation3 [shape = 's32[1]{0}', space=sflag, size = 0x4, scoped, tag = 'scoped memory for tpu_custom_call.1']
    #allocation4 [shape = 's32[1]{0}', space=sflag, size = 0x4, scoped, tag = 'scoped memory for tpu_custom_call.1']
    #allocation5 [shape = 'u8[8192]{0}', space=vmem, size = 0x2000, scoped, tag = 'input window, operand 1, single buffered']
    #allocation6 [shape = 's32[1]{0}', space=sflag, size = 0x4, scoped, tag = 'scoped memory for tpu_custom_call.1']
    #allocation7 [shape = 'u8[8192]{0}', space=vmem, size = 0x2000, scoped, tag = 'input window, operand 2, single buffered']
    #allocation8 [shape = 'u8[4096]{0}', space=vmem, size = 0x1000, scoped, tag = 'output window, operand 0, single buffered']
    %8 = vsyncpa [#allocation3], 0
    %9 = vsyncpa [#allocation6], 0
    %10 = vsyncpa [#allocation4], 0
    // Predicated region
    $region2: #{tpu_custom_call.1} parent=1 // pred_check
      _
    $region3: #{tpu_custom_call.1} parent=1 // pred_check_branch
      %12 = sbr.rel (0) target = $region5
    $region4: #{tpu_custom_call.1} parent=1 // pred_region
      %s14 = ssub.s32 256, 256
      %15 = vsyncadd [#allocation3], %s14
      %s16 = sshll.u32 [#allocation2], 4
      %s17 = int_to_ptr.vmem [resolvable:$true] %s16
      %22 = dma.hbm_to_vmem [thread:$0]  %s0, 256, %s17, [#allocation3], 128, 128, 8
    $region5: #{tpu_custom_call.1} parent=1 // pred_fallthru
      _
    // Predicated region
    $region6: #{tpu_custom_call.1} parent=1 // pred_check
      _
    $region7: #{tpu_custom_call.1} parent=1 // pred_check_branch
      %24 = sbr.rel (0) target = $region9
    $region8: #{tpu_custom_call.1} parent=1 // pred_region
      %s26 = ssub.s32 256, 256
      %27 = vsyncadd [#allocation6], %s26
      %s28 = sshll.u32 [#allocation5], 4
      %s29 = int_to_ptr.vmem [resolvable:$true] %s28
      %34 = dma.hbm_to_vmem [thread:$0]  %s1, 256, %s29, [#allocation6], 128, 128, 8
    $region9: #{tpu_custom_call.1} parent=1 // pred_fallthru
      _
    // Predicated region
    $region10: #{tpu_custom_call.1} parent=1 // pred_check
      _
    $region11: #{tpu_custom_call.1} parent=1 // pred_check_branch
      %36 = sbr.rel (0) target = $region13
    $region12: #{tpu_custom_call.1} parent=1 // pred_region
      %s38 = ssub.s32 256, 256
      %39 = vsyncadd [#allocation6], %s38
      %s40 = sshll.u32 [#allocation7], 4
      %s41 = int_to_ptr.vmem [resolvable:$true] %s40
      %46 = dma.hbm_to_vmem [thread:$0]  %s2, 256, %s41, [#allocation6], 128, 128, 8
    $region13: #{tpu_custom_call.1} parent=1 // pred_fallthru
      _
    // Predicated region
    $region14: #{tpu_custom_call.1} parent=1 // pred_check
      _
    $region15: #{tpu_custom_call.1} parent=1 // pred_check_branch
      %48 = sbr.rel (0) target = $region17
    $region16: #{tpu_custom_call.1} parent=1 // pred_region
      %49 = dma.done [#allocation3], 256
    $region17: #{tpu_custom_call.1} parent=1 // pred_fallthru
      _
    // Predicated region
    $region18: #{tpu_custom_call.1} parent=1 // pred_check
      _
    $region19: #{tpu_custom_call.1} parent=1 // pred_check_branch
      %51 = sbr.rel (0) target = $region21
    $region20: #{tpu_custom_call.1} parent=1 // pred_region
      %52 = dma.done [#allocation6], 256
    $region21: #{tpu_custom_call.1} parent=1 // pred_fallthru
      _
    // Predicated region
    $region22: #{tpu_custom_call.1} parent=1 // pred_check
      _
    $region23: #{tpu_custom_call.1} parent=1 // pred_check_branch
      %54 = sbr.rel (0) target = $region25
    $region24: #{tpu_custom_call.1} parent=1 // pred_region
      %55 = dma.done [#allocation6], 256
    $region25: #{tpu_custom_call.1} parent=1 // pred_fallthru
      _
    %v56 = vld [vmem:[#allocation2] sm:$0xff]
    %v57 = vld [vmem:[#allocation2 + $0x8] sm:$0xff]
    %v58 = vld [vmem:[#allocation7] sm:$0xff]
    %v59 = vld [vmem:[#allocation7 + $0x8] sm:$0xff]
    %v60 = vld [vmem:[#allocation5] sm:$0xff]
    %v61 = vld [vmem:[#allocation5 + $0x8] sm:$0xff]
    %vm62 = vcmp.gt.s32.totalorder %v60, 0
    %vm63 = vcmp.gt.s32.totalorder %v61, 0
    %v64 = vsel %vm62, 1, 0
    %v65 = vsel %vm63, 1, 0
    %v66 = vcvt.s32.f32 %v64
    %v67 = vcvt.s32.f32 %v65
    %68 = vrot.lane.b32.xlu0 %v66, 1
    %v69 = vpop.permute.xlu0 %68
    %70 = vrot.lane.b32.xlu0 %v67, 1
    %v71 = vpop.permute.xlu0 %70
    %v72 = vlaneseq
    %v73 = vand.u32 %v72, 127
    %vm74 = vcmp.lt.s32.totalorder %v73, 0
    %v75 = vsub.s32 0, %v73
    %v76 = vsel %vm74, %v75, %v73
    %v77 = vshrl.u32 %v76, 5
    %v78 = vand.u32 %v76, 31
    %v79 = vsub.s32 0, %v78
    %v80 = vsel %vm74, %v79, %v78
    %vm81 = vcmp.ne.s32.totalorder %v80, 0
    %vm82 = vcmp.lt.s32.totalorder %v80, 0
    %vm83 = vmand %vm82, %vm81
    %v84 = vadd.s32 %v80, 32
    %v85 = vsel %vm83, %v84, %v80
    %vm86 = vcmp.eq.s32.totalorder %v85, 0
    %v87 = vsel %vm86, 1.0, %v69
    %v88 = vsel %vm86, 1.0, %v71
    %s89 = smul.u32 0, 16
    %v90 = vlaneseq
    %v91 = vshrl.u32 %v90, 7
    %v92 = vadd.s32 %v91, 8
    %v93 = vstv %s89
    %v94 = vadd.s32 %v93, %v91
    %v95 = vadd.s32 %v93, %v92
    %vm96 = vcmp.lt.s32.totalorder %v94, 4
    %vm97 = vcmp.lt.s32.totalorder %v95, 4
    %v98 = vsel %vm96, %v87, 0.0
    %v99 = vsel %vm97, %v88, 0.0
    %v100 = vsub.f32 0.0, %v56
    %v101 = vsub.f32 0.0, %v57
    %v102 = vmul.f32 %v100, %v58
    %v103 = vmul.f32 %v101, %v59
    %v104 = vmul.f32 %v102, %v98
    %v105 = vmul.f32 %v103, %v99
    %v106 = vadd.f32 %v104, %v105
    %107 = vadd.xlane.f32.xlu0 %v106
    %v108 = vpop.xlane.xlu0 %107
    %v109 = vrot.slane %v108, 4
    %v110 = vadd.f32 %v108, %v109
    %v111 = vrot.slane %v110, 2
    %v112 = vadd.f32 %v110, %v111
    %v113 = vrot.slane %v112, 1
    %v114 = vadd.f32 %v112, %v113
    %s115 = vtos %v114
    %v116 = vadd.f32 %v98, %v99
    %117 = vadd.xlane.f32.xlu0 %v116
    %v118 = vpop.xlane.xlu0 %117
    %v119 = vrot.slane %v118, 4
    %v120 = vadd.f32 %v118, %v119
    %v121 = vrot.slane %v120, 2
    %v122 = vadd.f32 %v120, %v121
    %v123 = vrot.slane %v122, 1
    %v124 = vadd.f32 %v122, %v123
    %s125 = vtos %v124
    %vm126 = vcmp.eq.s32.totalorder %v91, 0
    %vm127 = vcmp.eq.s32.totalorder %v73, 0
    %vm128 = vmand %vm126, %vm127
    %vm129 = vcmp.eq.s32.totalorder %v73, 1
    %vm130 = vmand %vm126, %vm129
    %v131 = vstv %s125
    %v132 = vsel %vm130, %v131, 0.0
    %v133 = vstv %s115
    %v134 = vsel %vm128, %v133, %v132
    %135 = vst [vmem:[#allocation8] sm:$0xff] %v134
    // Predicated region
    $region26: #{tpu_custom_call.1} parent=1 // pred_check
      _
    $region27: #{tpu_custom_call.1} parent=1 // pred_check_branch
      %137 = sbr.rel (0) target = $region29
    $region28: #{tpu_custom_call.1} parent=1 // pred_region
      %s139 = ssub.s32 128, 128
      %140 = vsyncadd [#allocation4], %s139
      %s142 = sshll.u32 [#allocation8], 4
      %s143 = int_to_ptr.vmem [resolvable:$true] %s142
      %145 = dma.vmem_to_hbm [thread:$0]  %s143, 128, %s3, [#allocation4]
    $region29: #{tpu_custom_call.1} parent=1 // pred_fallthru
      _
    // Predicated region
    $region30: #{tpu_custom_call.1} parent=1 // pred_check
      _
    $region31: #{tpu_custom_call.1} parent=1 // pred_check_branch
      %147 = sbr.rel (0) target = $region33
    $region32: #{tpu_custom_call.1} parent=1 // pred_region
      %148 = dma.done [#allocation4], 128
    $region33: #{tpu_custom_call.1} parent=1 // pred_fallthru
      _
    %149 = vsyncpa [#allocation3], 1
    %150 = vsyncpa [#allocation6], 1
    %151 = vsyncpa [#allocation4], 1

</llo_original>
